<compile_context>
chip_gen: v7x
topology: tpu7x:2x2x1
jax: 0.10.0
libtpu: 0.0.40
codegen_flags: <defaults>
</compile_context>

<pallas_src>
import functools
import math

import jax
import jax.numpy as jnp
from jax.experimental import pallas as pl
from jax.experimental.pallas import tpu as pltpu

_MASK_VALUE = -1e30


def _vmem_limit_bytes():
    """Per-chip scoped-VMEM limit: ~3/4 of physical, capped at 96 MiB."""
    cap = None
    try:
        cap = getattr(pltpu.get_tpu_info(), "vmem_capacity_bytes", None)
    except Exception:
        cap = None
    if not cap:
        return 64 * 1024 * 1024
    return int(min(cap * 3 // 4, 96 * 1024 * 1024))


_VMEM_LIMIT = _vmem_limit_bytes()


def _preferred_attn_block():
    """v5e: 128 (1 vst slot, no bf16 VALU -> avoid vreg spill); v6e/v7x: 256."""
    try:
        kind = jax.devices()[0].device_kind.lower()
    except Exception:
        return 256
    return 128 if "v5" in kind else 256


def _pick_block(n, preferred):
    """Largest tile <= preferred that divides n (or n itself if small/odd)."""
    if n <= preferred:
        return n
    for b in (preferred, 256, 128, 64, 32, 16, 8):
        if b <= preferred and n % b == 0:
            return b
    return n


# ---------------------------------------------------------------------------
# 1) / 3)  Generic fused linear:  (R, C) @ (C, N) + b
#          bf16 MXU operands, f32 accumulation, bias fused, out_dtype cast.
# ---------------------------------------------------------------------------
def _linear_kernel(x_ref, w_ref, b_ref, o_ref):
    x = x_ref[...].astype(jnp.bfloat16)                       # bf16 MXU operand
    acc = jnp.dot(x, w_ref[...], preferred_element_type=jnp.float32)
    o_ref[...] = (acc + b_ref[...]).astype(o_ref.dtype)


def _linear(x2d, w, b, out_dtype):
    R, C = x2d.shape
    N = w.shape[1]
    br = _pick_block(R, 512)
    # Keep the whole (C, N) bf16 weight resident when it comfortably fits VMEM
    # (double buffered); otherwise tile the output dim (v7x / large C models).
    bn = N if C * N * 2 <= 8 * 1024 * 1024 else _pick_block(N, 1536)
    return pl.pallas_call(
        _linear_kernel,
        out_shape=jax.ShapeDtypeStruct((R, N), out_dtype),
        grid_spec=pltpu.PrefetchScalarGridSpec(
            num_scalar_prefetch=0,
            grid=(R // br, N // bn),
            in_specs=[
                pl.BlockSpec((br, C), lambda i, j: (i, 0)),
                pl.BlockSpec((C, bn), lambda i, j: (0, j)),
                pl.BlockSpec((1, bn), lambda i, j: (0, j)),
            ],
            out_specs=pl.BlockSpec((br, bn), lambda i, j: (i, j)),
        ),
        compiler_params=pltpu.CompilerParams(
            dimension_semantics=("parallel", "parallel"),
            vmem_limit_bytes=_VMEM_LIMIT),
    )(x2d, w, b)


# ---------------------------------------------------------------------------
# 2) Flash attention over (B*H, T, hd) with causal masking + online softmax
# ---------------------------------------------------------------------------
def _flash_kernel(q_ref, k_ref, v_ref, o_ref, m_scr, l_scr, acc_scr,
                  *, sm_scale, block_q, block_k):
    qi = pl.program_id(1)
    ki = pl.program_id(2)

    @pl.when(ki == 0)
    def _init():
        m_scr[...] = jnp.full_like(m_scr, -jnp.inf)
        l_scr[...] = jnp.zeros_like(l_scr)
        acc_scr[...] = jnp.zeros_like(acc_scr)

    q_start = qi * block_q
    k_start = ki * block_k
    # Blocks strictly above the causal diagonal contribute nothing: skip.
    needs_compute = k_start <= q_start + (block_q - 1)
    # Blocks strictly below the diagonal need no mask at all.
    fully_unmasked = k_start + (block_k - 1) <= q_start

    @pl.when(needs_compute)
    def _compute():
        q = (q_ref[...] * sm_scale).astype(q_ref.dtype)       # scale q, not s
        k = k_ref[...]
        v = v_ref[...]
        s = jax.lax.dot_general(q, k, (((1,), (1,)), ((), ())),
                                preferred_element_type=jnp.float32)

        def update(scores):
            m_prev = m_scr[...]                                # (bq, 128)
            m_new = jnp.maximum(m_prev,
                                jnp.max(scores, axis=-1, keepdims=True))
            alpha = jnp.exp(m_prev - m_new)                    # (bq, 128)
            p = jnp.exp(scores - m_new[:, 0:1])                # (bq, bk)
            l_scr[...] = alpha * l_scr[...] + jnp.sum(p, axis=-1, keepdims=True)
            acc_scr[...] = alpha[:, 0:1] * acc_scr[...] + jnp.dot(
                p.astype(v.dtype), v, preferred_element_type=jnp.float32)
            m_scr[...] = m_new

        @pl.when(fully_unmasked)
        def _no_mask():
            update(s)

        @pl.when(jnp.logical_not(fully_unmasked))
        def _diag_mask():                                      # diagonal block only
            rows = q_start + jax.lax.broadcasted_iota(
                jnp.int32, (block_q, block_k), 0)
            cols = k_start + jax.lax.broadcasted_iota(
                jnp.int32, (block_q, block_k), 1)
            update(jnp.where(rows >= cols, s, _MASK_VALUE))

    @pl.when(ki == pl.num_programs(2) - 1)
    def _finalize():
        inv_l = pl.reciprocal(l_scr[...], approx=True)         # EUP slot, ~free
        o_ref[...] = (acc_scr[...] * inv_l[:, 0:1]).astype(o_ref.dtype)


def _flash_attention(q, k, v, *, sm_scale, block_q, block_k):
    BH, T, hd = q.shape
    # Online-softmax guard: with square blocks every computed block has at
    # least one unmasked column per row (diagonal or below). Do not tune
    # block_k independently without adding an all-masked-row guard.
    assert block_q == block_k
    assert T % block_q == 0

    def kv_index_map(b, qi, ki):
        # Clamp above-diagonal steps to the last useful block: the block index
        # does not change on those steps, so Pallas skips the K/V DMA.
        last = (qi * block_q + block_q - 1) // block_k
        return (b, jnp.minimum(ki, last), 0)

    kernel = functools.partial(_flash_kernel, sm_scale=sm_scale,
                               block_q=block_q, block_k=block_k)
    return pl.pallas_call(
        kernel,
        out_shape=jax.ShapeDtypeStruct((BH, T, hd), q.dtype),
        grid_spec=pltpu.PrefetchScalarGridSpec(
            num_scalar_prefetch=0,
            grid=(BH, T // block_q, T // block_k),
            in_specs=[
                pl.BlockSpec((None, block_q, hd), lambda b, qi, ki: (b, qi, 0)),
                pl.BlockSpec((None, block_k, hd), kv_index_map),
                pl.BlockSpec((None, block_k, hd), kv_index_map),
            ],
            out_specs=pl.BlockSpec((None, block_q, hd),
                                   lambda b, qi, ki: (b, qi, 0)),
            scratch_shapes=[
                pltpu.VMEM((block_q, 128), jnp.float32),   # running max (lane-dense)
                pltpu.VMEM((block_q, 128), jnp.float32),   # running denom
                pltpu.VMEM((block_q, hd), jnp.float32),    # output accumulator
            ]),
        compiler_params=pltpu.CompilerParams(
            dimension_semantics=("parallel", "parallel", "arbitrary"),
            vmem_limit_bytes=_VMEM_LIMIT),
    )(q, k, v)


# ---------------------------------------------------------------------------
# Full module forward
# ---------------------------------------------------------------------------
def causal_self_attention(x, params, n_head):
    """x: (B, T, C) float32; returns (B, T, C) float32 = c_proj(attn(c_attn(x)))."""
    wqkv, bqkv, wproj, bproj = params
    B, T, C = x.shape
    assert C % n_head == 0
    hd = C // n_head

    # 1) fused QKV projection (bf16 output feeds the attention kernel)
    qkv = _linear(x.reshape(B * T, C), wqkv, bqkv, jnp.bfloat16)       # (B*T, 3C)

    # head-major layout for attention (XLA-side reshapes, not in-kernel)
    qkv = qkv.reshape(B, T, 3, n_head, hd).transpose(2, 0, 3, 1, 4)    # (3,B,H,T,hd)
    q = qkv[0].reshape(B * n_head, T, hd)
    k = qkv[1].reshape(B * n_head, T, hd)
    v = qkv[2].reshape(B * n_head, T, hd)

    # 2) causal flash attention
    blk = _pick_block(T, _preferred_attn_block())
    y = _flash_attention(q, k, v, sm_scale=1.0 / math.sqrt(hd),
                         block_q=blk, block_k=blk)                     # (B*H, T, hd)

    # 3) merge heads host-side, then a single full-C output projection
    y = y.reshape(B, n_head, T, hd).transpose(0, 2, 1, 3).reshape(B * T, C)
    out = _linear(y, wproj, bproj, x.dtype)                            # (B*T, C)
    return out.reshape(B, T, C)


# ---------------------------------------------------------------------------
# Params + pure-JAX reference
# ---------------------------------------------------------------------------
def make_params(key, C):
    k1, k2, k3, k4 = jax.random.split(key, 4)
    s = 1.0 / math.sqrt(C)
    wqkv = (s * jax.random.normal(k1, (C, 3 * C), jnp.float32)).astype(jnp.bfloat16)
    bqkv = 0.1 * jax.random.normal(k2, (1, 3 * C), jnp.float32)
    wproj = (s * jax.random.normal(k3, (C, C), jnp.float32)).astype(jnp.bfloat16)
    bproj = 0.1 * jax.random.normal(k4, (1, C), jnp.float32)
    return wqkv, bqkv, wproj, bproj


def reference(x, params, n_head):
    wqkv, bqkv, wproj, bproj = params
    B, T, C = x.shape
    hd = C // n_head
    w1 = wqkv.astype(jnp.float32)
    w2 = wproj.astype(jnp.float32)
    qkv = x @ w1 + bqkv[0]
    q, k, v = jnp.split(qkv, 3, axis=-1)
    q = q.reshape(B, T, n_head, hd).transpose(0, 2, 1, 3)
    k = k.reshape(B, T, n_head, hd).transpose(0, 2, 1, 3)
    v = v.reshape(B, T, n_head, hd).transpose(0, 2, 1, 3)
    s = jnp.einsum('bhqd,bhkd->bhqk', q, k) / math.sqrt(hd)
    mask = jnp.tril(jnp.ones((T, T), bool))
    s = jnp.where(mask, s, -jnp.inf)
    p = jax.nn.softmax(s, axis=-1)
    y = jnp.einsum('bhqk,bhkd->bhqd', p, v)
    y = y.transpose(0, 2, 1, 3).reshape(B, T, C)
    return y @ w2 + bproj[0]


if __name__ == "__main__":
    B, T, C, n_head = 2, 8, 32, 4
    key = jax.random.PRNGKey(0)
    kx, kp = jax.random.split(key)
    x = jax.random.normal(kx, (B, T, C), jnp.float32)
    params = make_params(kp, C)

    out = causal_self_attention(x, params, n_head)
    out = jax.block_until_ready(out)
    assert out.shape == (B, T, C)

    ref = reference(x, params, n_head)
    scale = jnp.max(jnp.abs(ref))
    err = jnp.max(jnp.abs(out - ref))
    # bf16 MXU operands + approx reciprocal => loose (but discriminative) tolerance
    assert err <= 3e-2 * scale + 1e-5, f"mismatch: max|err|={err}, scale={scale}"
    print("KERNEL_OK")
</pallas_src>

<mosaic_0001>
module attributes {stable_mosaic.version = 11 : i64} {
  func.func @_linear_kernel(%arg0: i32, %arg1: i32, %arg2: memref<16x32xf32, #tpu.memory_space<vmem>>, %arg3: memref<32x96xbf16, #tpu.memory_space<vmem>>, %arg4: memref<1x96xf32, #tpu.memory_space<vmem>>, %arg5: memref<16x96xbf16, #tpu.memory_space<vmem>>) attributes {dimension_semantics = [#tpu.dimension_semantics<parallel>, #tpu.dimension_semantics<parallel>], iteration_bounds = array<i64: 1, 1>, scalar_prefetch = 0 : i64, scratch_operands = 0 : i64, tpu.core_type = #tpu.core_type<tc>, window_params = [{transform_indices = @transform_0, window_bounds = array<i64: 16, 32>}, {transform_indices = @transform_1, window_bounds = array<i64: 32, 96>}, {transform_indices = @transform_2, window_bounds = array<i64: 1, 96>}, {transform_indices = @transform_3, window_bounds = array<i64: 16, 96>}]} {
    %c0 = arith.constant 0 : index
    %c0_0 = arith.constant 0 : index
    %0 = vector.load %arg2[%c0, %c0_0] : memref<16x32xf32, #tpu.memory_space<vmem>>, vector<16x32xf32>
    %1 = arith.truncf %0 : vector<16x32xf32> to vector<16x32xbf16>
    %c0_1 = arith.constant 0 : index
    %c0_2 = arith.constant 0 : index
    %2 = vector.load %arg3[%c0_1, %c0_2] : memref<32x96xbf16, #tpu.memory_space<vmem>>, vector<32x96xbf16>
    %cst = arith.constant dense<0.000000e+00> : vector<16x96xf32>
    %3 = tpu.matmul %1, %2, %cst {dimension_numbers = #tpu.dot_dimension_numbers<[1], [0], [0], [1], [0, 0, 1, 1], [], []>} : vector<16x32xbf16>, vector<32x96xbf16>, vector<16x96xf32> -> vector<16x96xf32>
    %c0_3 = arith.constant 0 : index
    %c0_4 = arith.constant 0 : index
    %4 = vector.load %arg4[%c0_3, %c0_4] : memref<1x96xf32, #tpu.memory_space<vmem>>, vector<1x96xf32>
    %5 = vector.broadcast %4 : vector<1x96xf32> to vector<16x96xf32>
    %6 = arith.addf %3, %5 : vector<16x96xf32>
    %7 = arith.truncf %6 : vector<16x96xf32> to vector<16x96xbf16>
    %c0_5 = arith.constant 0 : index
    %c0_6 = arith.constant 0 : index
    %8 = vector.load %arg5[%c0_5, %c0_6] : memref<16x96xbf16, #tpu.memory_space<vmem>>, vector<16x96xbf16>
    tpu.vector_store %arg5[%c0_5, %c0_6], %7 {strides = array<i32>} : memref<16x96xbf16, #tpu.memory_space<vmem>>, vector<16x96xbf16>,
    return
  }
  func.func @transform_0(%arg0: i32, %arg1: i32) -> (i32, i32) {
    %c0_i32 = arith.constant 0 : i32
    %c0_i32_0 = arith.constant 0 : i32
    return %arg0, %c0_i32 : i32, i32
  }
  func.func @transform_1(%arg0: i32, %arg1: i32) -> (i32, i32) {
    %c0_i32 = arith.constant 0 : i32
    %c0_i32_0 = arith.constant 0 : i32
    return %c0_i32, %arg1 : i32, i32
  }
  func.func @transform_2(%arg0: i32, %arg1: i32) -> (i32, i32) {
    %c0_i32 = arith.constant 0 : i32
    %c0_i32_0 = arith.constant 0 : i32
    return %c0_i32, %arg1 : i32, i32
  }
  func.func @transform_3(%arg0: i32, %arg1: i32) -> (i32, i32) {
    %c0_i32 = arith.constant 0 : i32
    return %arg0, %arg1 : i32, i32
  }
}

</mosaic_0001>

<llo_original>
// kernel: tpu_custom_call.1
$region0: #{tpu_custom_call.1}
  #allocation0 [shape = 'u32[]', space=smem, size = 0x4, offset = 0x4, fixed_abs, tag = 'smem constant byte address 0x4 - core index']
  #allocation1 [shape = 'u32[144,128]{1,0:T(1,128)}', space=vmem, size = 0x12000, scoped, tag = 'internal scratch']
  %s0 = inlined_call_operand.hbm [shape: f32[16,32], index: 0, kind: input, shape index: {}]
  %s1 = inlined_call_operand.hbm [shape: bf16[32,96], index: 1, kind: input, shape index: {}]
  %s2 = inlined_call_operand.hbm [shape: f32[1,96], index: 2, kind: input, shape index: {}]
  %s3 = inlined_call_operand.hbm [shape: bf16[16,96], index: 3, kind: output, shape index: {}]
  %s4 = sld [smem:[#allocation0]]
  $region34: #{tpu_custom_call.1} parent=0
    _
  %s6 = ssub.s32 1, %s4
  %s7 = scalar_select 0, %s6, %s4
  $region1: #{tpu_custom_call.1} parent=0
    #allocation2 [shape = 'u8[8192]{0}', space=vmem, size = 0x2000, scoped, tag = 'input window, operand 0, single buffered']
    #allocation3 [shape = 's32[1]{0}', space=sflag, size = 0x4, scoped, tag = 'scoped memory for tpu_custom_call.1']
    #allocation4 [shape = 's32[1]{0}', space=sflag, size = 0x4, scoped, tag = 'scoped memory for tpu_custom_call.1']
    #allocation5 [shape = 'u8[8192]{0}', space=vmem, size = 0x2000, scoped, tag = 'input window, operand 1, single buffered']
    #allocation6 [shape = 's32[1]{0}', space=sflag, size = 0x4, scoped, tag = 'scoped memory for tpu_custom_call.1']
    #allocation7 [shape = 'u8[512]{0}', space=vmem, size = 0x400, scoped, tag = 'input window, operand 2, single buffered']
    #allocation8 [shape = 'u8[4096]{0}', space=vmem, size = 0x1000, scoped, tag = 'output window, operand 0, single buffered']
    %8 = vsyncpa [#allocation3], 0
    %9 = vsyncpa [#allocation6], 0
    %10 = vsyncpa [#allocation4], 0
    // Predicated region
    $region2: #{tpu_custom_call.1} parent=1 // pred_check
      _
    $region3: #{tpu_custom_call.1} parent=1 // pred_check_branch
      %12 = sbr.rel (0) target = $region5
    $region4: #{tpu_custom_call.1} parent=1 // pred_region
      %s14 = ssub.s32 256, 256
      %15 = vsyncadd [#allocation3], %s14
      %s16 = sshll.u32 [#allocation2], 4
      %s17 = int_to_ptr.vmem [resolvable:$true] %s16
      %22 = dma.hbm_to_vmem [thread:$0]  %s0, 256, %s17, [#allocation3], 128, 128, 8
    $region5: #{tpu_custom_call.1} parent=1 // pred_fallthru
      _
    // Predicated region
    $region6: #{tpu_custom_call.1} parent=1 // pred_check
      _
    $region7: #{tpu_custom_call.1} parent=1 // pred_check_branch
      %24 = sbr.rel (0) target = $region9
    $region8: #{tpu_custom_call.1} parent=1 // pred_region
      %s26 = ssub.s32 256, 256
      %27 = vsyncadd [#allocation6], %s26
      %s28 = sshll.u32 [#allocation5], 4
      %s29 = int_to_ptr.vmem [resolvable:$true] %s28
      %34 = dma.hbm_to_vmem [thread:$0]  %s1, 256, %s29, [#allocation6], 64, 64, 4
    $region9: #{tpu_custom_call.1} parent=1 // pred_fallthru
      _
    // Predicated region
    $region10: #{tpu_custom_call.1} parent=1 // pred_check
      _
    $region11: #{tpu_custom_call.1} parent=1 // pred_check_branch
      %36 = sbr.rel (0) target = $region13
    $region12: #{tpu_custom_call.1} parent=1 // pred_region
      %s38 = ssub.s32 16, 16
      %39 = vsyncadd [#allocation6], %s38
      %s41 = sshll.u32 [#allocation7], 4
      %s42 = int_to_ptr.vmem [resolvable:$true] %s41
      %44 = dma.hbm_to_vmem [thread:$0]  %s2, 16, %s42, [#allocation6]
    $region13: #{tpu_custom_call.1} parent=1 // pred_fallthru
      _
    // Predicated region
    $region14: #{tpu_custom_call.1} parent=1 // pred_check
      _
    $region15: #{tpu_custom_call.1} parent=1 // pred_check_branch
      %46 = sbr.rel (0) target = $region17
    $region16: #{tpu_custom_call.1} parent=1 // pred_region
      %47 = dma.done [#allocation3], 256
    $region17: #{tpu_custom_call.1} parent=1 // pred_fallthru
      _
    // Predicated region
    $region18: #{tpu_custom_call.1} parent=1 // pred_check
      _
    $region19: #{tpu_custom_call.1} parent=1 // pred_check_branch
      %49 = sbr.rel (0) target = $region21
    $region20: #{tpu_custom_call.1} parent=1 // pred_region
      %50 = dma.done [#allocation6], 256
    $region21: #{tpu_custom_call.1} parent=1 // pred_fallthru
      _
    // Predicated region
    $region22: #{tpu_custom_call.1} parent=1 // pred_check
      _
    $region23: #{tpu_custom_call.1} parent=1 // pred_check_branch
      %52 = sbr.rel (0) target = $region25
    $region24: #{tpu_custom_call.1} parent=1 // pred_region
      %53 = dma.done [#allocation6], 16
    $region25: #{tpu_custom_call.1} parent=1 // pred_fallthru
      _
    %v55 = vld [vmem:[#allocation2] sm:$0xff]
    %v56 = vld [vmem:[#allocation2 + $0x8] sm:$0xff]
    %v57 = vpack.c.bf16 %v56, %v55
    %v58 = vld [vmem:[#allocation5] sm:$0xf]
    %v59 = vld [vmem:[#allocation5 + $0x4] sm:$0xf]
    %v60 = vld [vmem:[#allocation5 + $0x8] sm:$0xf]
    %v61 = vld [vmem:[#allocation5 + $0xc] sm:$0xf]
    %v62 = vld [vmem:[#allocation7] sm:$0x1]
    %v64 = vlaneseq
    %v65 = vshrl.u32 %v64, 7
    %v66 = vsub.s32 0, %v65
    %v67 = vrot.slane %v62, %v66
    %v73 = vunpack.c.l.b16 %v58
    %v74 = vunpack.c.l.b16 %v59
    %v75 = vunpack.c.l.b16 %v60
    %v76 = vunpack.c.l.b16 %v61
    %v77 = vpack.c.b16 %v74, %v73
    %v78 = vpack.c.b16 %v76, %v75
    %vm81 = vcmask 261120
    %v83 = vsel %vm81, %v57, 0
    %85 = vmatprep.subr.bf16.mxu0 0
    %86 = vmatpush1.bf16.msra.mxu0 %v77
    %87 = vmatprep.subr.bf16.mxu0 0
    %88 = vmatpush1.bf16.msra.mxu0 %v78
    %89 = vmatprep.subr.bf16.mxu0 0
    %90 = vmatpush1.bf16.msra.mxu0 0
    %91 = vmatprep.subr.bf16.mxu0 0
    %92 = vmatpush1.bf16.msra.mxu0 0
    %93 = vmatprep.subr.bf16.mxu0 0
    %94 = vmatpush1.bf16.msra.mxu0 0
    %95 = vmatprep.subr.bf16.mxu0 0
    %96 = vmatpush1.bf16.msra.mxu0 0
    %97 = vmatprep.subr.bf16.mxu0 0
    %98 = vmatpush1.bf16.msra.mxu0 0
    %99 = vmatprep.subr.bf16.mxu0 0
    %100 = vmatpush1.bf16.msra.mxu0 0
    %101 = vmatprep.subr.bf16.mxu0 0
    %102 = vmatpush1.bf16.msra.mxu0 0
    %103 = vmatprep.subr.bf16.mxu0 0
    %104 = vmatpush1.bf16.msra.mxu0 0
    %105 = vmatprep.subr.bf16.mxu0 0
    %106 = vmatpush1.bf16.msra.mxu0 0
    %107 = vmatprep.subr.bf16.mxu0 0
    %108 = vmatpush1.bf16.msra.mxu0 0
    %109 = vmatprep.subr.bf16.mxu0 0
    %110 = vmatpush1.bf16.msra.mxu0 0
    %111 = vmatprep.subr.bf16.mxu0 0
    %112 = vmatpush1.bf16.msra.mxu0 0
    %113 = vmatprep.subr.bf16.mxu0 0
    %114 = vmatpush1.bf16.msra.mxu0 0
    %115 = vmatprep.subr.bf16.mxu0 0
    %116 = vmatpush1.bf16.msra.mxu0 0
    %117 = vmatprep.mubr.bf16.mxu0 0
    %118 = vmatmul.mubr.bf16.gmra.mrb[0].mxu0 %v83
    %v119 = vpop.f32.mrb[0].mxu0
    %v120 = vadd.f32 %v67, %v119
    %v121 = vpop.f32.mrb[0].mxu0
    %v122 = vpop.f32.mrb[0].mxu0
    %v123 = vadd.f32 %v67, %v122
    %v124 = vpop.f32.mrb[0].mxu0
    %125 = vdwg.mxu0
    %v126 = vpack.c.bf16 %v123, %v120
    %v128 = vunpack.c.l.b16 %v126
    %v129 = vunpack.c.h.b16 %v126
    %v130 = vpack.c.b16 %v128, %v128
    %v131 = vpack.c.b16 %v129, %v129
    %vm134 = vcmask 781312
    %135 = vst.msk [vmem:[#allocation8] sm:$0xf] %vm134, %v130
    %136 = vst.msk [vmem:[#allocation8 + $0x4] sm:$0xf] %vm134, %v131
    // Predicated region
    $region26: #{tpu_custom_call.1} parent=1 // pred_check
      _
    $region27: #{tpu_custom_call.1} parent=1 // pred_check_branch
      %138 = sbr.rel (0) target = $region29
    $region28: #{tpu_custom_call.1} parent=1 // pred_region
      %s140 = ssub.s32 128, 128
      %141 = vsyncadd [#allocation4], %s140
      %s142 = sshll.u32 [#allocation8], 4
      %s143 = int_to_ptr.vmem [resolvable:$true] %s142
      %148 = dma.vmem_to_hbm [thread:$0]  %s143, 128, %s3, [#allocation4], 64, 64, 4
    $region29: #{tpu_custom_call.1} parent=1 // pred_fallthru
      _
    // Predicated region
    $region30: #{tpu_custom_call.1} parent=1 // pred_check
      _
    $region31: #{tpu_custom_call.1} parent=1 // pred_check_branch
      %150 = sbr.rel (0) target = $region33
    $region32: #{tpu_custom_call.1} parent=1 // pred_region
      %151 = dma.done [#allocation4], 128
    $region33: #{tpu_custom_call.1} parent=1 // pred_fallthru
      _
    %152 = vsyncpa [#allocation3], 1
    %153 = vsyncpa [#allocation6], 1
    %154 = vsyncpa [#allocation4], 1

</llo_original>
